<compile_context>
chip_gen: v6e
topology: v6e:2x2x1
jax: 0.10.0
libtpu: 0.0.40
codegen_flags: <defaults>
</compile_context>

<pallas_src>
import functools

import jax
import jax.numpy as jnp
from jax.experimental import pallas as pl
from jax.experimental.pallas import tpu as pltpu


def _gather_clamp_kernel(idx_ref, table_ref, out_ref, *, clip, task_num):
    # table_ref: (T, D) context table, resident in VMEM (constant index_map).
    # idx_ref:   (B_TILE, 1) int32 task indices for this output block.
    # out_ref:   (B_TILE, D) gathered + clamped rows.
    table = jnp.clip(table_ref[...].astype(jnp.float32), -clip, clip)   # (T, D)

    idx_col = idx_ref[...]                                              # (B_TILE, 1)
    b_tile = idx_col.shape[0]
    iota_t = jax.lax.broadcasted_iota(jnp.int32, (b_tile, task_num), 1)  # (B_TILE, T)
    one_hot = (idx_col == iota_t).astype(jnp.float32)                   # (B_TILE, T)

    # Exact gather via one-hot matmul on the MXU (1.0*x + 0.0*rest == x in f32).
    gathered = jnp.dot(one_hot, table, preferred_element_type=jnp.float32)
    out_ref[...] = gathered.astype(out_ref.dtype)


def context_model_forward(context_hat, idx, *, context_clip=1.0, block_rows=512):
    """Pallas equivalent of ContextModel.forward(idx) (meta=True, fixed_idx=None).

    context_hat: (task_num, D) float table (the raw `_context_hat` parameter).
    idx:         (..., 1) integer task indices.
    returns:     (..., D) gathered + clamped context rows.
    """
    assert idx.shape[-1] == 1, f"last dim of idx should be 1, got {idx.shape}"
    batch_shape = idx.shape[:-1]
    flat_idx = idx.reshape(-1).astype(jnp.int32)
    B = flat_idx.shape[0]
    T, D = context_hat.shape

    # Sublane alignment for the output dtype (8 rows for f32, 16 for bf16, ...).
    itemsize = jnp.dtype(context_hat.dtype).itemsize
    sublane = 8 * max(1, 4 // itemsize)

    b_rounded = ((B + sublane - 1) // sublane) * sublane
    tile = min(int(block_rows), b_rounded)
    tile = ((tile + sublane - 1) // sublane) * sublane
    b_pad = ((B + tile - 1) // tile) * tile
    grid = (b_pad // tile,)

    # Pad indices with 0 (a valid row); padded output rows are sliced off below.
    idx_col = jnp.pad(flat_idx, (0, b_pad - B)).reshape(b_pad, 1)

    kernel = functools.partial(
        _gather_clamp_kernel, clip=float(context_clip), task_num=T)

    out = pl.pallas_call(
        kernel,
        out_shape=jax.ShapeDtypeStruct((b_pad, D), context_hat.dtype),
        grid_spec=pltpu.PrefetchScalarGridSpec(
            num_scalar_prefetch=0,
            grid=grid,
            in_specs=[
                # Per-block slice of task indices.
                pl.BlockSpec((tile, 1), lambda i: (i, 0)),
                # Whole table, constant block index -> loaded once, stays resident.
                pl.BlockSpec((T, D), lambda i: (0, 0)),
            ],
            out_specs=pl.BlockSpec((tile, D), lambda i: (i, 0)),
        ),
        compiler_params=pltpu.CompilerParams(
            dimension_semantics=("parallel",)),
    )(idx_col, context_hat)

    return out[:B].reshape(*batch_shape, D)


if __name__ == "__main__":
    # Deterministic synthetic parameters (module __init__ shapes):
    #   _context_hat: (task_num, max_context_dim) = randn * init_scale
    task_num = 8
    max_context_dim = 128     # lane-dense (multiple of 128)
    init_scale = 0.5
    context_clip = 1.0

    key = jax.random.PRNGKey(0)
    k_ctx, k_idx, k_idx2 = jax.random.split(key, 3)

    context_hat_param = (
        jax.random.normal(k_ctx, (task_num, max_context_dim), dtype=jnp.float32)
        * init_scale
    )
    ref_table = jnp.clip(context_hat_param, -context_clip, context_clip)

    # Small case: arbitrary batch dims with trailing dim 1, as the module expects.
    idx = jax.random.randint(k_idx, (4, 2, 1), 0, task_num, dtype=jnp.int32)
    out = context_model_forward(context_hat_param, idx, context_clip=context_clip)
    out = jax.block_until_ready(out)
    ref = ref_table[idx[..., 0]]
    assert out.shape == (*idx.shape[:-1], max_context_dim)
    assert jnp.allclose(out, ref, atol=1e-6, rtol=1e-6)

    # Larger case exercising multiple grid blocks + row padding.
    idx2 = jax.random.randint(k_idx2, (37, 3, 1), 0, task_num, dtype=jnp.int32)
    out2 = context_model_forward(
        context_hat_param, idx2, context_clip=context_clip, block_rows=16)
    out2 = jax.block_until_ready(out2)
    ref2 = ref_table[idx2[..., 0]]
    assert out2.shape == (*idx2.shape[:-1], max_context_dim)
    assert jnp.allclose(out2, ref2, atol=1e-6, rtol=1e-6)

    # TODO(synk): forward(idx=None) returns an empty tensor in PyTorch; that
    # degenerate branch has no compute and is handled outside any kernel.

    print("KERNEL_OK")
</pallas_src>

<mosaic_0001>
module attributes {stable_mosaic.version = 11 : i64} {
  func.func @_gather_clamp_kernel(%arg0: i32, %arg1: memref<8x1xi32, #tpu.memory_space<vmem>>, %arg2: memref<8x128xf32, #tpu.memory_space<vmem>>, %arg3: memref<8x128xf32, #tpu.memory_space<vmem>>) attributes {dimension_semantics = [#tpu.dimension_semantics<parallel>], iteration_bounds = array<i64: 1>, scalar_prefetch = 0 : i64, scratch_operands = 0 : i64, tpu.core_type = #tpu.core_type<tc>, window_params = [{transform_indices = @transform_0, window_bounds = array<i64: 8, 1>}, {pipeline_mode = #tpu.pipeline_mode<synchronous>, transform_indices = @transform_1, window_bounds = array<i64: 8, 128>}, {transform_indices = @transform_2, window_bounds = array<i64: 8, 128>}]} {
    %c0 = arith.constant 0 : index
    %c0_0 = arith.constant 0 : index
    %0 = vector.load %arg2[%c0, %c0_0] : memref<8x128xf32, #tpu.memory_space<vmem>>, vector<8x128xf32>
    %cst = arith.constant -1.000000e+00 : f32
    %cst_1 = arith.constant 1.000000e+00 : f32
    %1 = vector.broadcast %cst : f32 to vector<8x128xf32>
    %2 = arith.maximumf %1, %0 : vector<8x128xf32>
    %3 = vector.broadcast %cst_1 : f32 to vector<8x128xf32>
    %4 = arith.minimumf %3, %2 : vector<8x128xf32>
    %c0_2 = arith.constant 0 : index
    %c0_3 = arith.constant 0 : index
    %5 = vector.load %arg1[%c0_2, %c0_3] : memref<8x1xi32, #tpu.memory_space<vmem>>, vector<8x1xi32>
    %6 = tpu.iota {dimensions = array<i32: 1>} : vector<8x8xi32>
    %7 = vector.broadcast %5 : vector<8x1xi32> to vector<8x8xi32>
    %8 = arith.cmpi eq, %7, %6 : vector<8x8xi32>
    %9 = arith.extui %8 : vector<8x8xi1> to vector<8x8xi32>
    %10 = arith.sitofp %9 : vector<8x8xi32> to vector<8x8xf32>
    %cst_4 = arith.constant dense<0.000000e+00> : vector<8x128xf32>
    %11 = tpu.matmul %10, %4, %cst_4 {dimension_numbers = #tpu.dot_dimension_numbers<[1], [0], [0], [1], [0, 0, 1, 1], [], []>} : vector<8x8xf32>, vector<8x128xf32>, vector<8x128xf32> -> vector<8x128xf32>
    %c0_5 = arith.constant 0 : index
    %c0_6 = arith.constant 0 : index
    %12 = vector.load %arg3[%c0_5, %c0_6] : memref<8x128xf32, #tpu.memory_space<vmem>>, vector<8x128xf32>
    tpu.vector_store %arg3[%c0_5, %c0_6], %11 {strides = array<i32>} : memref<8x128xf32, #tpu.memory_space<vmem>>, vector<8x128xf32>,
    return
  }
  func.func @transform_0(%arg0: i32) -> (i32, i32) {
    %c0_i32 = arith.constant 0 : i32
    %c0_i32_0 = arith.constant 0 : i32
    return %arg0, %c0_i32 : i32, i32
  }
  func.func @transform_1(%arg0: i32) -> (i32, i32) {
    %c0_i32 = arith.constant 0 : i32
    %c0_i32_0 = arith.constant 0 : i32
    %c0_i32_1 = arith.constant 0 : i32
    return %c0_i32, %c0_i32_0 : i32, i32
  }
  func.func @transform_2(%arg0: i32) -> (i32, i32) {
    %c0_i32 = arith.constant 0 : i32
    %c0_i32_0 = arith.constant 0 : i32
    return %arg0, %c0_i32 : i32, i32
  }
}

</mosaic_0001>

<llo_original>
// kernel: tpu_custom_call.1
$region0: #{tpu_custom_call.1}
  #allocation0 [shape = 'u32[]', space=smem, size = 0x4, offset = 0x4, fixed_abs, tag = 'smem constant byte address 0x4 - core index']
  #allocation1 [shape = 'u32[144,128]{1,0:T(1,128)}', space=vmem, size = 0x12000, scoped, tag = 'internal scratch']
  %s0 = inlined_call_operand.vmem [shape: s32[8,1], index: 0, kind: input, shape index: {}]
  %s1 = inlined_call_operand.vmem [shape: f32[8,128], index: 1, kind: input, shape index: {}]
  %s2 = inlined_call_operand.hbm [shape: f32[8,128], index: 2, kind: output, shape index: {}]
  %s3 = sld [smem:[#allocation0]]
  $region18: #{tpu_custom_call.1} parent=0
    _
  %s5 = ssub.s32 1, %s3
  %s6 = scalar_select 0, %s5, %s3
  $region1: #{tpu_custom_call.1} parent=0
    #allocation2 [shape = 'u8[4096]{0}', space=vmem, size = 0x1000, scoped, tag = 'output window, operand 0, single buffered']
    #allocation3 [shape = 's32[1]{0}', space=sflag, size = 0x4, scoped, tag = 'scoped memory for tpu_custom_call.1']
    %7 = vsyncpa [#allocation3], 0
    // Predicated region
    $region2: #{tpu_custom_call.1} parent=1 // pred_check
      _
    $region3: #{tpu_custom_call.1} parent=1 // pred_check_branch
      %9 = sbr.rel (0) target = $region5
    $region4: #{tpu_custom_call.1} parent=1 // pred_region
      _
    $region5: #{tpu_custom_call.1} parent=1 // pred_fallthru
      _
    // Predicated region
    $region6: #{tpu_custom_call.1} parent=1 // pred_check
      _
    $region7: #{tpu_custom_call.1} parent=1 // pred_check_branch
      %11 = sbr.rel (0) target = $region9
    $region8: #{tpu_custom_call.1} parent=1 // pred_region
      _
    $region9: #{tpu_custom_call.1} parent=1 // pred_fallthru
      _
    %v12 = vld [vmem:[%s1] sm:$0xff]
    %v13 = vmax.f32 %v12, -1.0
    %v14 = vmin.f32 %v13, 1.0
    %v15 = vld [vmem:[%s0] sm:$0xff]
    %v16 = vlaneseq
    %v17 = vand.u32 %v16, 127
    %18 = vset.pattern.permute.xlu0 0
    %19 = vperm.xlu0 %18, %v15
    %v20 = vpop.permute.xlu0 %19
    %vm21 = vcmp.eq.s32.totalorder %v20, %v17
    %v22 = vsel %vm21, 1, 0
    %v23 = vcvt.s32.f32 %v22
    %vm24 = vcmask 64512
    %v26 = vsel %vm24, %v23, 0
    %28 = vmatprep.subr.mxu0 0.0
    %29 = vmatpush1.msra.mxu0 0.0
    %30 = vmatprep.subr.mxu0 0.0
    %31 = vmatpush1.msra.mxu0 0.0
    %32 = vmatprep.subr.mxu0 0.0
    %33 = vmatpush1.msra.mxu0 0.0
    %34 = vmatprep.subr.mxu0 0.0
    %35 = vmatpush1.msra.mxu0 0.0
    %36 = vmatprep.subr.mxu0 0.0
    %37 = vmatpush1.msra.mxu0 0.0
    %38 = vmatprep.subr.mxu0 0.0
    %39 = vmatpush1.msra.mxu0 0.0
    %40 = vmatprep.subr.mxu0 0.0
    %41 = vmatpush1.msra.mxu0 0.0
    %42 = vmatprep.subr.mxu0 0.0
    %43 = vmatpush1.msra.mxu0 0.0
    %44 = vmatprep.subr.mxu0 0.0
    %45 = vmatpush1.msra.mxu0 0.0
    %46 = vmatprep.subr.mxu0 0.0
    %47 = vmatpush1.msra.mxu0 0.0
    %48 = vmatprep.subr.mxu0 0.0
    %49 = vmatpush1.msra.mxu0 0.0
    %50 = vmatprep.subr.mxu0 0.0
    %51 = vmatpush1.msra.mxu0 0.0
    %52 = vmatprep.subr.mxu0 0.0
    %53 = vmatpush1.msra.mxu0 0.0
    %54 = vmatprep.subr.mxu0 0.0
    %55 = vmatpush1.msra.mxu0 0.0
    %56 = vmatprep.subr.mxu0 0.0
    %57 = vmatpush1.msra.mxu0 0.0
    %58 = vmatprep.subr.mxu0 0.0
    %59 = vmatpush1.msra.mxu0 %v14
    %60 = vmatprep.subr.mxu0 0.0
    %61 = vmatpush2.msra.mxu0 0.0
    %62 = vmatprep.subr.mxu0 0.0
    %63 = vmatpush2.msra.mxu0 0.0
    %64 = vmatprep.subr.mxu0 0.0
    %65 = vmatpush2.msra.mxu0 0.0
    %66 = vmatprep.subr.mxu0 0.0
    %67 = vmatpush2.msra.mxu0 0.0
    %68 = vmatprep.subr.mxu0 0.0
    %69 = vmatpush2.msra.mxu0 0.0
    %70 = vmatprep.subr.mxu0 0.0
    %71 = vmatpush2.msra.mxu0 0.0
    %72 = vmatprep.subr.mxu0 0.0
    %73 = vmatpush2.msra.mxu0 0.0
    %74 = vmatprep.subr.mxu0 0.0
    %75 = vmatpush2.msra.mxu0 0.0
    %76 = vmatprep.subr.mxu0 0.0
    %77 = vmatpush2.msra.mxu0 0.0
    %78 = vmatprep.subr.mxu0 0.0
    %79 = vmatpush2.msra.mxu0 0.0
    %80 = vmatprep.subr.mxu0 0.0
    %81 = vmatpush2.msra.mxu0 0.0
    %82 = vmatprep.subr.mxu0 0.0
    %83 = vmatpush2.msra.mxu0 0.0
    %84 = vmatprep.subr.mxu0 0.0
    %85 = vmatpush2.msra.mxu0 0.0
    %86 = vmatprep.subr.mxu0 0.0
    %87 = vmatpush2.msra.mxu0 0.0
    %88 = vmatprep.subr.mxu0 0.0
    %89 = vmatpush2.msra.mxu0 0.0
    %90 = vmatprep.subr.mxu0 0.0
    %91 = vmatpush2.msra.mxu0 0.0
    %92 = vmatprep.mubr.f32.mxu0 0.0
    %93 = vmatmul.mubr.f32.gmra.mxu0 %v26
    %v94 = vpop.f32.mrf.mxu0
    %v95 = vadd.f32 0.0, %v94
    %v96 = vpop.f32.mrf.mxu0
    %97 = vdwg.mxu0
    %98 = vst [vmem:[#allocation2] sm:$0xff] %v95
    // Predicated region
    $region10: #{tpu_custom_call.1} parent=1 // pred_check
      _
    $region11: #{tpu_custom_call.1} parent=1 // pred_check_branch
      %100 = sbr.rel (0) target = $region13
    $region12: #{tpu_custom_call.1} parent=1 // pred_region
      %s102 = ssub.s32 128, 128
      %103 = vsyncadd [#allocation3], %s102
      %s105 = sshll.u32 [#allocation2], 4
      %s106 = int_to_ptr.vmem [resolvable:$true] %s105
      %108 = dma.vmem_to_hbm [thread:$0]  %s106, 128, %s2, [#allocation3]
    $region13: #{tpu_custom_call.1} parent=1 // pred_fallthru
      _
    // Predicated region
    $region14: #{tpu_custom_call.1} parent=1 // pred_check
      _
    $region15: #{tpu_custom_call.1} parent=1 // pred_check_branch
      %110 = sbr.rel (0) target = $region17
    $region16: #{tpu_custom_call.1} parent=1 // pred_region
      %111 = dma.done [#allocation3], 128
    $region17: #{tpu_custom_call.1} parent=1 // pred_fallthru
      _
    %112 = vsyncpa [#allocation3], 1

</llo_original>
